<compile_context>
chip_gen: v7x
topology: tpu7x:2x2x1
jax: 0.10.0
libtpu: 0.0.40
codegen_flags: <defaults>
</compile_context>

<pallas_src>
import functools

import jax
import jax.numpy as jnp
from jax.experimental import pallas as pl
from jax.experimental.pallas import tpu as pltpu


# ----------------------------------------------------------------------------
# Fused kernel: (folded backbone+projector-L1) Linear -> ReLU -> Linear
#               -> F.normalize -> NT-Xent loss, exploiting z1 == z2.
# ----------------------------------------------------------------------------
def _make_simclr_kernel(n, temperature):
    inv_t = 1.0 / float(temperature)

    def kernel(x_ref, wf_ref, bf_ref, w2_ref, b2_ref, loss_ref):
        # ---- encoder (bf16 MXU operands, f32 accumulation) -------------------
        # folded backbone + projector layer 1, then ReLU
        h = jnp.dot(x_ref[...], wf_ref[...],
                    preferred_element_type=jnp.float32) + bf_ref[...]   # (N, F)
        h = jnp.maximum(h, 0.0)
        # projector layer 2
        z = jnp.dot(h.astype(jnp.bfloat16), w2_ref[...],
                    preferred_element_type=jnp.float32) + b2_ref[...]   # (N, P)

        # ---- NT-Xent loss (all f32) ------------------------------------------
        # F.normalize(dim=1), eps=1e-12
        nrm = jnp.sqrt(jnp.sum(z * z, axis=1, keepdims=True))
        zn = z / jnp.maximum(nrm, 1e-12)                                # (N, P)

        # Identity-augment branch: z1 == z2 == zn.  The (2N, 2N) cosine sim is
        # [[S, S], [S, S]] with S = zn @ zn.T.  For each of the 2N rows:
        #   lse_i = logsumexp_{j != i} sim[i, j]/T
        #         = log(2 * sum_j exp(S[i',j]/T) - exp(S[i',i']/T)),  i' = i mod N
        #   pos_i = sim[i, pair(i)]/T = S[i',i']/T
        # and rows i and i+N are identical, so the 2N-row sum is 2x the N-row sum.
        s = jax.lax.dot_general(zn, zn, (((1,), (1,)), ((), ())),
                                preferred_element_type=jnp.float32) * inv_t   # (N, N)
        diag = jnp.sum(zn * zn, axis=1, keepdims=True) * inv_t          # (N, 1) = S_ii/T

        mx = jnp.max(s, axis=1, keepdims=True)                          # (N, 1)
        row_sum = (2.0 * jnp.sum(jnp.exp(s - mx), axis=1, keepdims=True)
                   - jnp.exp(diag - mx))
        lse = mx + jnp.log(row_sum)                                     # (N, 1)

        # loss = sum_{2N rows} (lse_i - pos_i) / (2N) = sum_{N rows} (...) / N
        loss_ref[0, 0] = jnp.sum(lse - diag) / jnp.float32(n)

    return kernel


def simclr_loss_fused(x_flat, params, temperature):
    wf, bf, w2, b2 = params
    n = x_flat.shape[0]
    kernel = _make_simclr_kernel(n, temperature)
    vmem_spec = pl.BlockSpec(memory_space=pltpu.MemorySpace.VMEM)
    loss = pl.pallas_call(
        kernel,
        out_shape=jax.ShapeDtypeStruct((1, 1), jnp.float32),
        # No grid: single invocation, whole (tiny) arrays resident in VMEM,
        # single-buffered — no pipeline prologue/epilogue overhead.
        in_specs=[vmem_spec, vmem_spec, vmem_spec, vmem_spec, vmem_spec],
        # Scalar loss returned through SMEM (no padded-VMEM-tile masked store).
        out_specs=pl.BlockSpec(memory_space=pltpu.MemorySpace.SMEM),
    )(x_flat, wf, bf, w2, b2)
    return loss[0, 0]


# ----------------------------------------------------------------------------
# Full SimCLR forward
# ----------------------------------------------------------------------------
@functools.partial(jax.jit, static_argnames=("temperature",))
def simclr_forward(x, params, temperature=0.5):
    # layout: x is NCHW (N, C, H, W), float32; identity augmentation -> x1 == x2
    n = x.shape[0]
    x_flat = x.reshape(n, -1).astype(jnp.bfloat16)   # pre-cast: halves x DMA
    return simclr_loss_fused(x_flat, params, temperature)


# ----------------------------------------------------------------------------
# Parameters
# ----------------------------------------------------------------------------
def init_params(key, in_dim, feature_size, projection_dim):
    # deterministic PyTorch-style Linear init: U(-1/sqrt(fan_in), 1/sqrt(fan_in))
    ks = jax.random.split(key, 6)

    def lin(kw, kb, fan_in, fan_out):
        bound = 1.0 / (fan_in ** 0.5)
        w = jax.random.uniform(kw, (fan_in, fan_out), jnp.float32, -bound, bound)
        b = jax.random.uniform(kb, (1, fan_out), jnp.float32, -bound, bound)
        return w, b

    wb, bb = lin(ks[0], ks[1], in_dim, feature_size)           # backbone
    w1, b1 = lin(ks[2], ks[3], feature_size, feature_size)     # projector layer 1
    w2, b2 = lin(ks[4], ks[5], feature_size, projection_dim)   # projector layer 2
    return (wb, bb, w1, b1, w2, b2)


def prepare_params(params):
    # Fold the backbone Linear into projector layer 1 (no nonlinearity between):
    #   (x @ wb + bb) @ w1 + b1 == x @ (wb @ w1) + (bb @ w1 + b1)
    # Fold in f32, then cast the fused weight to bf16 (MXU-native, halves the
    # dominant HBM input); biases stay f32.
    wb, bb, w1, b1, w2, b2 = params
    wf = jnp.dot(wb, w1)                       # (in_dim, feature_size) f32
    bf = jnp.dot(bb, w1) + b1                  # (1, feature_size)      f32
    return (wf.astype(jnp.bfloat16), bf, w2.astype(jnp.bfloat16), b2)


# ----------------------------------------------------------------------------
# Pure-JAX reference: same (folded, bf16-operand) encoder path, but the loss
# is built the PyTorch way from the full (2N, 2N) similarity matrix — this
# validates the in-kernel z1==z2 algebraic reduction.
# ----------------------------------------------------------------------------
def simclr_reference(x, params, temperature=0.5):
    wf, bf, w2, b2 = params
    n = x.shape[0]
    m = 2 * n
    xf = x.reshape(n, -1).astype(jnp.bfloat16)
    h = jnp.dot(xf, wf, preferred_element_type=jnp.float32) + bf
    h = jnp.maximum(h, 0.0)
    z = jnp.dot(h.astype(jnp.bfloat16), w2, preferred_element_type=jnp.float32) + b2
    zn = z / jnp.maximum(jnp.sqrt(jnp.sum(z * z, axis=1, keepdims=True)), 1e-12)
    rep = jnp.concatenate([zn, zn], axis=0)                    # identity augment
    sim = (rep @ rep.T) / temperature
    masked = jnp.where(jnp.eye(m, dtype=bool), -jnp.inf, sim)
    lse = jax.scipy.special.logsumexp(masked, axis=1)
    l_pos = jnp.diagonal(sim, offset=n)
    r_pos = jnp.diagonal(sim, offset=-n)
    return (jnp.sum(lse) - jnp.sum(l_pos) - jnp.sum(r_pos)) / m


if __name__ == "__main__":
    N, C, H, W = 2, 4, 16, 16
    FEATURE_SIZE = 32
    PROJECTION_DIM = 128
    TEMPERATURE = 0.5

    key = jax.random.PRNGKey(0)
    kx, kp = jax.random.split(key)
    x = jax.random.normal(kx, (N, C, H, W), jnp.float32)
    params = prepare_params(init_params(kp, C * H * W, FEATURE_SIZE, PROJECTION_DIM))

    loss = simclr_forward(x, params, temperature=TEMPERATURE)
    jax.block_until_ready(loss)
    assert loss.shape == () and jnp.isfinite(loss)

    loss_ref = simclr_reference(x, params, temperature=TEMPERATURE)
    assert jnp.allclose(loss, loss_ref, rtol=5e-3, atol=5e-3), (loss, loss_ref)

    print("KERNEL_OK")
</pallas_src>

<mosaic_0001>
module attributes {stable_mosaic.version = 11 : i64} {
  func.func @kernel(%arg0: memref<2x1024xbf16, #tpu.memory_space<vmem>>, %arg1: memref<1024x32xbf16, #tpu.memory_space<vmem>>, %arg2: memref<1x32xf32, #tpu.memory_space<vmem>>, %arg3: memref<32x128xbf16, #tpu.memory_space<vmem>>, %arg4: memref<1x128xf32, #tpu.memory_space<vmem>>, %arg5: memref<1x1xf32, #tpu.memory_space<smem>>) attributes {dimension_semantics = [], scalar_prefetch = 0 : i64, scratch_operands = 0 : i64, tpu.core_type = #tpu.core_type<tc>} {
    %c0 = arith.constant 0 : index
    %c0_0 = arith.constant 0 : index
    %0 = vector.load %arg0[%c0, %c0_0] : memref<2x1024xbf16, #tpu.memory_space<vmem>>, vector<2x1024xbf16>
    %c0_1 = arith.constant 0 : index
    %c0_2 = arith.constant 0 : index
    %1 = vector.load %arg1[%c0_1, %c0_2] : memref<1024x32xbf16, #tpu.memory_space<vmem>>, vector<1024x32xbf16>
    %cst = arith.constant dense<0.000000e+00> : vector<2x32xf32>
    %2 = tpu.matmul %0, %1, %cst {dimension_numbers = #tpu.dot_dimension_numbers<[1], [0], [0], [1], [0, 0, 1, 1], [], []>} : vector<2x1024xbf16>, vector<1024x32xbf16>, vector<2x32xf32> -> vector<2x32xf32>
    %c0_3 = arith.constant 0 : index
    %c0_4 = arith.constant 0 : index
    %3 = vector.load %arg2[%c0_3, %c0_4] : memref<1x32xf32, #tpu.memory_space<vmem>>, vector<1x32xf32>
    %4 = vector.broadcast %3 : vector<1x32xf32> to vector<2x32xf32>
    %5 = arith.addf %2, %4 : vector<2x32xf32>
    %cst_5 = arith.constant 0.000000e+00 : f32
    %6 = vector.broadcast %cst_5 : f32 to vector<2x32xf32>
    %7 = arith.maximumf %5, %6 : vector<2x32xf32>
    %8 = arith.truncf %7 : vector<2x32xf32> to vector<2x32xbf16>
    %c0_6 = arith.constant 0 : index
    %c0_7 = arith.constant 0 : index
    %9 = vector.load %arg3[%c0_6, %c0_7] : memref<32x128xbf16, #tpu.memory_space<vmem>>, vector<32x128xbf16>
    %cst_8 = arith.constant dense<0.000000e+00> : vector<2x128xf32>
    %10 = tpu.matmul %8, %9, %cst_8 {dimension_numbers = #tpu.dot_dimension_numbers<[1], [0], [0], [1], [0, 0, 1, 1], [], []>} : vector<2x32xbf16>, vector<32x128xbf16>, vector<2x128xf32> -> vector<2x128xf32>
    %c0_9 = arith.constant 0 : index
    %c0_10 = arith.constant 0 : index
    %11 = vector.load %arg4[%c0_9, %c0_10] : memref<1x128xf32, #tpu.memory_space<vmem>>, vector<1x128xf32>
    %12 = vector.broadcast %11 : vector<1x128xf32> to vector<2x128xf32>
    %13 = arith.addf %10, %12 : vector<2x128xf32>
    %14 = arith.mulf %13, %13 : vector<2x128xf32>
    %cst_11 = arith.constant dense<0.000000e+00> : vector<2xf32>
    %15 = vector.multi_reduction <add>, %14, %cst_11 [1] : vector<2x128xf32> to vector<2xf32>
    %16 = vector.shape_cast %15 : vector<2xf32> to vector<2x1xf32>
    %17 = math.sqrt %16 : vector<2x1xf32>
    %cst_12 = arith.constant 9.99999996E-13 : f32
    %18 = vector.broadcast %cst_12 : f32 to vector<2x1xf32>
    %19 = arith.maximumf %17, %18 : vector<2x1xf32>
    %20 = vector.broadcast %19 : vector<2x1xf32> to vector<2x128xf32>
    %21 = arith.divf %13, %20 : vector<2x128xf32>
    %cst_13 = arith.constant dense<0.000000e+00> : vector<2x2xf32>
    %22 = tpu.matmul %21, %21, %cst_13 {dimension_numbers = #tpu.dot_dimension_numbers<[1], [1], [0], [0], [0, 0, 1, 0], [], []>} : vector<2x128xf32>, vector<2x128xf32>, vector<2x2xf32> -> vector<2x2xf32>
    %cst_14 = arith.constant 2.000000e+00 : f32
    %23 = vector.broadcast %cst_14 : f32 to vector<2x2xf32>
    %24 = arith.mulf %22, %23 : vector<2x2xf32>
    %25 = arith.mulf %21, %21 : vector<2x128xf32>
    %cst_15 = arith.constant dense<0.000000e+00> : vector<2xf32>
    %26 = vector.multi_reduction <add>, %25, %cst_15 [1] : vector<2x128xf32> to vector<2xf32>
    %27 = vector.shape_cast %26 : vector<2xf32> to vector<2x1xf32>
    %cst_16 = arith.constant 2.000000e+00 : f32
    %28 = vector.broadcast %cst_16 : f32 to vector<2x1xf32>
    %29 = arith.mulf %27, %28 : vector<2x1xf32>
    %cst_17 = arith.constant dense<0xFF800000> : vector<2xf32>
    %30 = vector.multi_reduction <maximumf>, %24, %cst_17 [1] : vector<2x2xf32> to vector<2xf32>
    %31 = vector.shape_cast %30 : vector<2xf32> to vector<2x1xf32>
    %32 = vector.broadcast %31 : vector<2x1xf32> to vector<2x2xf32>
    %33 = arith.subf %24, %32 : vector<2x2xf32>
    %34 = math.exp %33 : vector<2x2xf32>
    %cst_18 = arith.constant dense<0.000000e+00> : vector<2xf32>
    %35 = vector.multi_reduction <add>, %34, %cst_18 [1] : vector<2x2xf32> to vector<2xf32>
    %36 = vector.shape_cast %35 : vector<2xf32> to vector<2x1xf32>
    %cst_19 = arith.constant 2.000000e+00 : f32
    %37 = vector.broadcast %cst_19 : f32 to vector<2x1xf32>
    %38 = arith.mulf %37, %36 : vector<2x1xf32>
    %39 = arith.subf %29, %31 : vector<2x1xf32>
    %40 = math.exp %39 : vector<2x1xf32>
    %41 = arith.subf %38, %40 : vector<2x1xf32>
    %42 = math.log %41 : vector<2x1xf32>
    %43 = arith.addf %31, %42 : vector<2x1xf32>
    %44 = arith.subf %43, %29 : vector<2x1xf32>
    %45 = vector.shape_cast %44 : vector<2x1xf32> to vector<1x2x1xf32>
    %cst_20 = arith.constant dense<0.000000e+00> : vector<1xf32>
    %46 = vector.multi_reduction <add>, %45, %cst_20 [1, 2] : vector<1x2x1xf32> to vector<1xf32>
    %47 = vector.shape_cast %46 : vector<1xf32> to vector<1x1x1xf32>
    %48 = vector.extract %47[0, 0, 0] : f32 from vector<1x1x1xf32>
    %cst_21 = arith.constant 2.000000e+00 : f32
    %49 = arith.divf %48, %cst_21 : f32
    %c0_22 = arith.constant 0 : index
    %c0_23 = arith.constant 0 : index
    %50 = memref.load %arg5[%c0_22, %c0_23] : memref<1x1xf32, #tpu.memory_space<smem>>
    memref.store %49, %arg5[%c0_22, %c0_23] : memref<1x1xf32, #tpu.memory_space<smem>>
    return
  }
}

</mosaic_0001>

<llo_original>
// kernel: simclr_forward.1
$region0: #{simclr_forward.1}
  #allocation0 [shape = 'u32[]', space=smem, size = 0x4, offset = 0x4, fixed_abs, tag = 'smem constant byte address 0x4 - core index']
  #allocation1 [shape = 'u32[144,128]{1,0:T(1,128)}', space=vmem, size = 0x12000, scoped, tag = 'internal scratch']
  %s0 = inlined_call_operand.vmem [shape: bf16[2,1024], index: 0, kind: input, shape index: {}]
  %s1 = inlined_call_operand.vmem [shape: bf16[1024,32], index: 1, kind: input, shape index: {}]
  %s2 = inlined_call_operand.vmem [shape: f32[1,32], index: 2, kind: input, shape index: {}]
  %s3 = inlined_call_operand.vmem [shape: bf16[32,128], index: 3, kind: input, shape index: {}]
  %s4 = inlined_call_operand.vmem [shape: f32[1,128], index: 4, kind: input, shape index: {}]
  %s5 = inlined_call_operand.hbm [shape: f32[1,1], index: 5, kind: output, shape index: {}]
  %s6 = sld [smem:[#allocation0]]
  $region30: #{simclr_forward.1} parent=0
    _
  %s8 = ssub.s32 1, %s6
  %s9 = scalar_select 0, %s8, %s6
  $region1: #{simclr_forward.1} parent=0
    #allocation2 [shape = 'u8[512]{0}', space=smem, size = 0x200, scoped, tag = 'output window, operand 0, single buffered']
    #allocation3 [shape = 's32[1]{0}', space=sflag, size = 0x4, scoped, tag = 'scoped memory for simclr_forward.1']
    %10 = vsyncpa [#allocation3], 0
    // Predicated region
    $region2: #{simclr_forward.1} parent=1 // pred_check
      _
    $region3: #{simclr_forward.1} parent=1 // pred_check_branch
      %12 = sbr.rel (0) target = $region5
    $region4: #{simclr_forward.1} parent=1 // pred_region
      _
    $region5: #{simclr_forward.1} parent=1 // pred_fallthru
      _
    // Predicated region
    $region6: #{simclr_forward.1} parent=1 // pred_check
      _
    $region7: #{simclr_forward.1} parent=1 // pred_check_branch
      %14 = sbr.rel (0) target = $region9
    $region8: #{simclr_forward.1} parent=1 // pred_region
      _
    $region9: #{simclr_forward.1} parent=1 // pred_fallthru
      _
    // Predicated region
    $region10: #{simclr_forward.1} parent=1 // pred_check
      _
    $region11: #{simclr_forward.1} parent=1 // pred_check_branch
      %16 = sbr.rel (0) target = $region13
    $region12: #{simclr_forward.1} parent=1 // pred_region
      _
    $region13: #{simclr_forward.1} parent=1 // pred_fallthru
      _
    // Predicated region
    $region14: #{simclr_forward.1} parent=1 // pred_check
      _
    $region15: #{simclr_forward.1} parent=1 // pred_check_branch
      %18 = sbr.rel (0) target = $region17
    $region16: #{simclr_forward.1} parent=1 // pred_region
      _
    $region17: #{simclr_forward.1} parent=1 // pred_fallthru
      _
    // Predicated region
    $region18: #{simclr_forward.1} parent=1 // pred_check
      _
    $region19: #{simclr_forward.1} parent=1 // pred_check_branch
      %20 = sbr.rel (0) target = $region21
    $region20: #{simclr_forward.1} parent=1 // pred_region
      _
    $region21: #{simclr_forward.1} parent=1 // pred_fallthru
      _
    %v22 = vld [vmem:[%s0] sm:$0xff]
    %v23 = vld [vmem:[%s1] sm:$0xf]
    %v24 = vld [vmem:[%s1 + $0x4] sm:$0xf]
    %v25 = vld [vmem:[%s1 + $0x8] sm:$0xf]
    %v26 = vld [vmem:[%s1 + $0xc] sm:$0xf]
    %v27 = vld [vmem:[%s1 + $0x10] sm:$0xf]
    %v28 = vld [vmem:[%s1 + $0x14] sm:$0xf]
    %v29 = vld [vmem:[%s1 + $0x18] sm:$0xf]
    %v30 = vld [vmem:[%s1 + $0x1c] sm:$0xf]
    %v31 = vld [vmem:[%s1 + $0x20] sm:$0xf]
    %v32 = vld [vmem:[%s1 + $0x24] sm:$0xf]
    %v33 = vld [vmem:[%s1 + $0x28] sm:$0xf]
    %v34 = vld [vmem:[%s1 + $0x2c] sm:$0xf]
    %v35 = vld [vmem:[%s1 + $0x30] sm:$0xf]
    %v36 = vld [vmem:[%s1 + $0x34] sm:$0xf]
    %v37 = vld [vmem:[%s1 + $0x38] sm:$0xf]
    %v38 = vld [vmem:[%s1 + $0x3c] sm:$0xf]
    %v39 = vld [vmem:[%s1 + $0x40] sm:$0xf]
    %v40 = vld [vmem:[%s1 + $0x44] sm:$0xf]
    %v41 = vld [vmem:[%s1 + $0x48] sm:$0xf]
    %v42 = vld [vmem:[%s1 + $0x4c] sm:$0xf]
    %v43 = vld [vmem:[%s1 + $0x50] sm:$0xf]
    %v44 = vld [vmem:[%s1 + $0x54] sm:$0xf]
    %v45 = vld [vmem:[%s1 + $0x58] sm:$0xf]
    %v46 = vld [vmem:[%s1 + $0x5c] sm:$0xf]
    %v47 = vld [vmem:[%s1 + $0x60] sm:$0xf]
    %v48 = vld [vmem:[%s1 + $0x64] sm:$0xf]
    %v49 = vld [vmem:[%s1 + $0x68] sm:$0xf]
    %v50 = vld [vmem:[%s1 + $0x6c] sm:$0xf]
    %v51 = vld [vmem:[%s1 + $0x70] sm:$0xf]
    %v52 = vld [vmem:[%s1 + $0x74] sm:$0xf]
    %v53 = vld [vmem:[%s1 + $0x78] sm:$0xf]
    %v54 = vld [vmem:[%s1 + $0x7c] sm:$0xf]
    %v55 = vld [vmem:[%s1 + $0x80] sm:$0xf]
    %v56 = vld [vmem:[%s1 + $0x84] sm:$0xf]
    %v57 = vld [vmem:[%s1 + $0x88] sm:$0xf]
    %v58 = vld [vmem:[%s1 + $0x8c] sm:$0xf]
    %v59 = vld [vmem:[%s1 + $0x90] sm:$0xf]
    %v60 = vld [vmem:[%s1 + $0x94] sm:$0xf]
    %v61 = vld [vmem:[%s1 + $0x98] sm:$0xf]
    %v62 = vld [vmem:[%s1 + $0x9c] sm:$0xf]
    %v63 = vld [vmem:[%s1 + $0xa0] sm:$0xf]
    %v64 = vld [vmem:[%s1 + $0xa4] sm:$0xf]
    %v65 = vld [vmem:[%s1 + $0xa8] sm:$0xf]
    %v66 = vld [vmem:[%s1 + $0xac] sm:$0xf]
    %v67 = vld [vmem:[%s1 + $0xb0] sm:$0xf]
    %v68 = vld [vmem:[%s1 + $0xb4] sm:$0xf]
    %v69 = vld [vmem:[%s1 + $0xb8] sm:$0xf]
    %v70 = vld [vmem:[%s1 + $0xbc] sm:$0xf]
    %v71 = vld [vmem:[%s1 + $0xc0] sm:$0xf]
    %v72 = vld [vmem:[%s1 + $0xc4] sm:$0xf]
    %v73 = vld [vmem:[%s1 + $0xc8] sm:$0xf]
    %v74 = vld [vmem:[%s1 + $0xcc] sm:$0xf]
    %v75 = vld [vmem:[%s1 + $0xd0] sm:$0xf]
    %v76 = vld [vmem:[%s1 + $0xd4] sm:$0xf]
    %v77 = vld [vmem:[%s1 + $0xd8] sm:$0xf]
    %v78 = vld [vmem:[%s1 + $0xdc] sm:$0xf]
    %v79 = vld [vmem:[%s1 + $0xe0] sm:$0xf]
    %v80 = vld [vmem:[%s1 + $0xe4] sm:$0xf]
    %v81 = vld [vmem:[%s1 + $0xe8] sm:$0xf]
    %v82 = vld [vmem:[%s1 + $0xec] sm:$0xf]
    %v83 = vld [vmem:[%s1 + $0xf0] sm:$0xf]
    %v84 = vld [vmem:[%s1 + $0xf4] sm:$0xf]
    %v85 = vld [vmem:[%s1 + $0xf8] sm:$0xf]
    %v86 = vld [vmem:[%s1 + $0xfc] sm:$0xf]
    %v87 = vld [vmem:[%s1 + $0x100] sm:$0xf]
    %v88 = vld [vmem:[%s1 + $0x104] sm:$0xf]
    %v89 = vld [vmem:[%s1 + $0x108] sm:$0xf]
    %v90 = vld [vmem:[%s1 + $0x10c] sm:$0xf]
    %v91 = vld [vmem:[%s1 + $0x110] sm:$0xf]
    %v92 = vld [vmem:[%s1 + $0x114] sm:$0xf]
    %v93 = vld [vmem:[%s1 + $0x118] sm:$0xf]
    %v94 = vld [vmem:[%s1 + $0x11c] sm:$0xf]
    %v95 = vld [vmem:[%s1 + $0x120] sm:$0xf]
    %v96 = vld [vmem:[%s1 + $0x124] sm:$0xf]
    %v97 = vld [vmem:[%s1 + $0x128] sm:$0xf]
    %v98 = vld [vmem:[%s1 + $0x12c] sm:$0xf]
    %v99 = vld [vmem:[%s1 + $0x130] sm:$0xf]
    %v100 = vld [vmem:[%s1 + $0x134] sm:$0xf]
    %v101 = vld [vmem:[%s1 + $0x138] sm:$0xf]
    %v102 = vld [vmem:[%s1 + $0x13c] sm:$0xf]
    %v103 = vld [vmem:[%s1 + $0x140] sm:$0xf]
    %v104 = vld [vmem:[%s1 + $0x144] sm:$0xf]
    %v105 = vld [vmem:[%s1 + $0x148] sm:$0xf]
    %v106 = vld [vmem:[%s1 + $0x14c] sm:$0xf]
    %v107 = vld [vmem:[%s1 + $0x150] sm:$0xf]
    %v108 = vld [vmem:[%s1 + $0x154] sm:$0xf]
    %v109 = vld [vmem:[%s1 + $0x158] sm:$0xf]
    %v110 = vld [vmem:[%s1 + $0x15c] sm:$0xf]
    %v111 = vld [vmem:[%s1 + $0x160] sm:$0xf]
    %v112 = vld [vmem:[%s1 + $0x164] sm:$0xf]
    %v113 = vld [vmem:[%s1 + $0x168] sm:$0xf]
    %v114 = vld [vmem:[%s1 + $0x16c] sm:$0xf]
    %v115 = vld [vmem:[%s1 + $0x170] sm:$0xf]
    %v116 = vld [vmem:[%s1 + $0x174] sm:$0xf]
    %v117 = vld [vmem:[%s1 + $0x178] sm:$0xf]
    %v118 = vld [vmem:[%s1 + $0x17c] sm:$0xf]
    %v119 = vld [vmem:[%s1 + $0x180] sm:$0xf]
    %v120 = vld [vmem:[%s1 + $0x184] sm:$0xf]
    %v121 = vld [vmem:[%s1 + $0x188] sm:$0xf]
    %v122 = vld [vmem:[%s1 + $0x18c] sm:$0xf]
    %v123 = vld [vmem:[%s1 + $0x190] sm:$0xf]
    %v124 = vld [vmem:[%s1 + $0x194] sm:$0xf]
    %v125 = vld [vmem:[%s1 + $0x198] sm:$0xf]
    %v126 = vld [vmem:[%s1 + $0x19c] sm:$0xf]
    %v127 = vld [vmem:[%s1 + $0x1a0] sm:$0xf]
    %v128 = vld [vmem:[%s1 + $0x1a4] sm:$0xf]
    %v129 = vld [vmem:[%s1 + $0x1a8] sm:$0xf]
    %v130 = vld [vmem:[%s1 + $0x1ac] sm:$0xf]
    %v131 = vld [vmem:[%s1 + $0x1b0] sm:$0xf]
    %v132 = vld [vmem:[%s1 + $0x1b4] sm:$0xf]
    %v133 = vld [vmem:[%s1 + $0x1b8] sm:$0xf]
    %v134 = vld [vmem:[%s1 + $0x1bc] sm:$0xf]
    %v135 = vld [vmem:[%s1 + $0x1c0] sm:$0xf]
    %v136 = vld [vmem:[%s1 + $0x1c4] sm:$0xf]
    %v137 = vld [vmem:[%s1 + $0x1c8] sm:$0xf]
    %v138 = vld [vmem:[%s1 + $0x1cc] sm:$0xf]
    %v139 = vld [vmem:[%s1 + $0x1d0] sm:$0xf]
    %v140 = vld [vmem:[%s1 + $0x1d4] sm:$0xf]
    %v141 = vld [vmem:[%s1 + $0x1d8] sm:$0xf]
    %v142 = vld [vmem:[%s1 + $0x1dc] sm:$0xf]
    %v143 = vld [vmem:[%s1 + $0x1e0] sm:$0xf]
    %v144 = vld [vmem:[%s1 + $0x1e4] sm:$0xf]
    %v145 = vld [vmem:[%s1 + $0x1e8] sm:$0xf]
    %v146 = vld [vmem:[%s1 + $0x1ec] sm:$0xf]
    %v147 = vld [vmem:[%s1 + $0x1f0] sm:$0xf]
    %v148 = vld [vmem:[%s1 + $0x1f4] sm:$0xf]
    %v149 = vld [vmem:[%s1 + $0x1f8] sm:$0xf]
    %v150 = vld [vmem:[%s1 + $0x1fc] sm:$0xf]
    %v151 = vld [vmem:[%s2] sm:$0x1]
    %v153 = vlaneseq
    %v154 = vshrl.u32 %v153, 7
    %v155 = vsub.s32 0, %v154
    %v156 = vrot.slane %v151, %v155
    %v159 = vcombine.high %v22, %v22
    %v161 = vunpack.c.l.s4 1966171168
    %v162 = vunpack.c.0.s8 %v161
    %v163 = vlaneseq
    %v164 = vshrl.u32 %v163, 7
    %v165 = vsub.s32 %v162, %v164
    %v166 = vrot.slane %v22, %v165
    %v168 = vunpack.c.l.s4 1966171168
    %v169 = vunpack.c.0.s8 %v168
    %v170 = vlaneseq
    %v171 = vshrl.u32 %v170, 7
    %v172 = vsub.s32 %v169, %v171
    %v173 = vrot.slane %v159, %v172
    %v174 = vcombine.high %v166, %v166
    %v175 = vcombine.high %v173, %v173
    %v177 = vunpack.c.l.s4 1966171168
    %v178 = vunpack.c.0.s8 %v177
    %v179 = vlaneseq
    %v180 = vshrl.u32 %v179, 7
    %v181 = vsub.s32 %v178, %v180
    %v182 = vrot.slane %v166, %v181
    %v184 = vunpack.c.l.s4 1966171168
    %v185 = vunpack.c.0.s8 %v184
    %v186 = vlaneseq
    %v187 = vshrl.u32 %v186, 7
    %v188 = vsub.s32 %v185, %v187
    %v189 = vrot.slane %v173, %v188
    %v191 = vunpack.c.l.s4 1966171168
    %v192 = vunpack.c.0.s8 %v191
    %v193 = vlaneseq
    %v194 = vshrl.u32 %v193, 7
    %v195 = vsub.s32 %v192, %v194
    %v196 = vrot.slane %v174, %v195
    %v198 = vunpack.c.l.s4 1966171168
    %v199 = vunpack.c.0.s8 %v198
    %v200 = vlaneseq
    %v201 = vshrl.u32 %v200, 7
    %v202 = vsub.s32 %v199, %v201
    %v203 = vrot.slane %v175, %v202
    %v204 = vcombine.high %v182, %v182
    %v205 = vcombine.high %v189, %v189
    %v206 = vcombine.high %v196, %v196
    %v207 = vcombine.high %v203, %v203
    %v344 = vunpack.c.l.b16 %v23
    %v345 = vunpack.c.l.b16 %v24
    %v346 = vunpack.c.l.b16 %v25
    %v347 = vunpack.c.l.b16 %v26
    %v348 = vunpack.c.l.b16 %v27
    %v349 = vunpack.c.l.b16 %v28
    %v350 = vunpack.c.l.b16 %v29
    %v351 = vunpack.c.l.b16 %v30
    %v352 = vunpack.c.l.b16 %v31
    %v353 = vunpack.c.l.b16 %v32
    %v354 = vunpack.c.l.b16 %v33
    %v355 = vunpack.c.l.b16 %v34
    %v356 = vunpack.c.l.b16 %v35
    %v357 = vunpack.c.l.b16 %v36
    %v358 = vunpack.c.l.b16 %v37
    %v359 = vunpack.c.l.b16 %v38
    %v360 = vunpack.c.l.b16 %v39
    %v361 = vunpack.c.l.b16 %v40
    %v362 = vunpack.c.l.b16 %v41
    %v363 = vunpack.c.l.b16 %v42
    %v364 = vunpack.c.l.b16 %v43
    %v365 = vunpack.c.l.b16 %v44
    %v366 = vunpack.c.l.b16 %v45
    %v367 = vunpack.c.l.b16 %v46
    %v368 = vunpack.c.l.b16 %v47
    %v369 = vunpack.c.l.b16 %v48
    %v370 = vunpack.c.l.b16 %v49
    %v371 = vunpack.c.l.b16 %v50
    %v372 = vunpack.c.l.b16 %v51
    %v373 = vunpack.c.l.b16 %v52
    %v374 = vunpack.c.l.b16 %v53
    %v375 = vunpack.c.l.b16 %v54
    %v376 = vunpack.c.l.b16 %v55
    %v377 = vunpack.c.l.b16 %v56
    %v378 = vunpack.c.l.b16 %v57
    %v379 = vunpack.c.l.b16 %v58
    %v380 = vunpack.c.l.b16 %v59
    %v381 = vunpack.c.l.b16 %v60
    %v382 = vunpack.c.l.b16 %v61
    %v383 = vunpack.c.l.b16 %v62
    %v384 = vunpack.c.l.b16 %v63
    %v385 = vunpack.c.l.b16 %v64
    %v386 = vunpack.c.l.b16 %v65
    %v387 = vunpack.c.l.b16 %v66
    %v388 = vunpack.c.l.b16 %v67
    %v389 = vunpack.c.l.b16 %v68
    %v390 = vunpack.c.l.b16 %v69
    %v391 = vunpack.c.l.b16 %v70
    %v392 = vunpack.c.l.b16 %v71
    %v393 = vunpack.c.l.b16 %v72
    %v394 = vunpack.c.l.b16 %v73
    %v395 = vunpack.c.l.b16 %v74
    %v396 = vunpack.c.l.b16 %v75
    %v397 = vunpack.c.l.b16 %v76
    %v398 = vunpack.c.l.b16 %v77
    %v399 = vunpack.c.l.b16 %v78
    %v400 = vunpack.c.l.b16 %v79
    %v401 = vunpack.c.l.b16 %v80
    %v402 = vunpack.c.l.b16 %v81
    %v403 = vunpack.c.l.b16 %v82
    %v404 = vunpack.c.l.b16 %v83
    %v405 = vunpack.c.l.b16 %v84
    %v406 = vunpack.c.l.b16 %v85
    %v407 = vunpack.c.l.b16 %v86
    %v408 = vunpack.c.l.b16 %v87
    %v409 = vunpack.c.l.b16 %v88
    %v410 = vunpack.c.l.b16 %v89
    %v411 = vunpack.c.l.b16 %v90
    %v412 = vunpack.c.l.b16 %v91
    %v413 = vunpack.c.l.b16 %v92
    %v414 = vunpack.c.l.b16 %v93
    %v415 = vunpack.c.l.b16 %v94
    %v416 = vunpack.c.l.b16 %v95
    %v417 = vunpack.c.l.b16 %v96
    %v418 = vunpack.c.l.b16 %v97
    %v419 = vunpack.c.l.b16 %v98
    %v420 = vunpack.c.l.b16 %v99
    %v421 = vunpack.c.l.b16 %v100
    %v422 = vunpack.c.l.b16 %v101
    %v423 = vunpack.c.l.b16 %v102
    %v424 = vunpack.c.l.b16 %v103
    %v425 = vunpack.c.l.b16 %v104
    %v426 = vunpack.c.l.b16 %v105
    %v427 = vunpack.c.l.b16 %v106
    %v428 = vunpack.c.l.b16 %v107
    %v429 = vunpack.c.l.b16 %v108
    %v430 = vunpack.c.l.b16 %v109
    %v431 = vunpack.c.l.b16 %v110
    %v432 = vunpack.c.l.b16 %v111
    %v433 = vunpack.c.l.b16 %v112
    %v434 = vunpack.c.l.b16 %v113
    %v435 = vunpack.c.l.b16 %v114
    %v436 = vunpack.c.l.b16 %v115
    %v437 = vunpack.c.l.b16 %v116
    %v438 = vunpack.c.l.b16 %v117
    %v439 = vunpack.c.l.b16 %v118
    %v440 = vunpack.c.l.b16 %v119
    %v441 = vunpack.c.l.b16 %v120
    %v442 = vunpack.c.l.b16 %v121
    %v443 = vunpack.c.l.b16 %v122
    %v444 = vunpack.c.l.b16 %v123
    %v445 = vunpack.c.l.b16 %v124
    %v446 = vunpack.c.l.b16 %v125
    %v447 = vunpack.c.l.b16 %v126
    %v448 = vunpack.c.l.b16 %v127
    %v449 = vunpack.c.l.b16 %v128
    %v450 = vunpack.c.l.b16 %v129
    %v451 = vunpack.c.l.b16 %v130
    %v452 = vunpack.c.l.b16 %v131
    %v453 = vunpack.c.l.b16 %v132
    %v454 = vunpack.c.l.b16 %v133
    %v455 = vunpack.c.l.b16 %v134
    %v456 = vunpack.c.l.b16 %v135
    %v457 = vunpack.c.l.b16 %v136
    %v458 = vunpack.c.l.b16 %v137
    %v459 = vunpack.c.l.b16 %v138
    %v460 = vunpack.c.l.b16 %v139
    %v461 = vunpack.c.l.b16 %v140
    %v462 = vunpack.c.l.b16 %v141
    %v463 = vunpack.c.l.b16 %v142
    %v464 = vunpack.c.l.b16 %v143
    %v465 = vunpack.c.l.b16 %v144
    %v466 = vunpack.c.l.b16 %v145
    %v467 = vunpack.c.l.b16 %v146
    %v468 = vunpack.c.l.b16 %v147
    %v469 = vunpack.c.l.b16 %v148
    %v470 = vunpack.c.l.b16 %v149
    %v471 = vunpack.c.l.b16 %v150
    %v472 = vpack.c.b16 %v345, %v344
    %v473 = vpack.c.b16 %v347, %v346
    %v474 = vpack.c.b16 %v349, %v348
    %v475 = vpack.c.b16 %v351, %v350
    %v476 = vpack.c.b16 %v353, %v352
    %v477 = vpack.c.b16 %v355, %v354
    %v478 = vpack.c.b16 %v357, %v356
    %v479 = vpack.c.b16 %v359, %v358
    %v480 = vpack.c.b16 %v361, %v360
    %v481 = vpack.c.b16 %v363, %v362
    %v482 = vpack.c.b16 %v365, %v364
    %v483 = vpack.c.b16 %v367, %v366
    %v484 = vpack.c.b16 %v369, %v368
    %v485 = vpack.c.b16 %v371, %v370
    %v486 = vpack.c.b16 %v373, %v372
    %v487 = vpack.c.b16 %v375, %v374
    %v488 = vpack.c.b16 %v377, %v376
    %v489 = vpack.c.b16 %v379, %v378
    %v490 = vpack.c.b16 %v381, %v380
    %v491 = vpack.c.b16 %v383, %v382
    %v492 = vpack.c.b16 %v385, %v384
    %v493 = vpack.c.b16 %v387, %v386
    %v494 = vpack.c.b16 %v389, %v388
    %v495 = vpack.c.b16 %v391, %v390
    %v496 = vpack.c.b16 %v393, %v392
    %v497 = vpack.c.b16 %v395, %v394
    %v498 = vpack.c.b16 %v397, %v396
    %v499 = vpack.c.b16 %v399, %v398
    %v500 = vpack.c.b16 %v401, %v400
    %v501 = vpack.c.b16 %v403, %v402
    %v502 = vpack.c.b16 %v405, %v404
    %v503 = vpack.c.b16 %v407, %v406
    %v504 = vpack.c.b16 %v409, %v408
    %v505 = vpack.c.b16 %v411, %v410
    %v506 = vpack.c.b16 %v413, %v412
    %v507 = vpack.c.b16 %v415, %v414
    %v508 = vpack.c.b16 %v417, %v416
    %v509 = vpack.c.b16 %v419, %v418
    %v510 = vpack.c.b16 %v421, %v420
    %v511 = vpack.c.b16 %v423, %v422
    %v512 = vpack.c.b16 %v425, %v424
    %v513 = vpack.c.b16 %v427, %v426
    %v514 = vpack.c.b16 %v429, %v428
    %v515 = vpack.c.b16 %v431, %v430
    %v516 = vpack.c.b16 %v433, %v432
    %v517 = vpack.c.b16 %v435, %v434
    %v518 = vpack.c.b16 %v437, %v436
    %v519 = vpack.c.b16 %v439, %v438
    %v520 = vpack.c.b16 %v441, %v440
    %v521 = vpack.c.b16 %v443, %v442
    %v522 = vpack.c.b16 %v445, %v444
    %v523 = vpack.c.b16 %v447, %v446
    %v524 = vpack.c.b16 %v449, %v448
    %v525 = vpack.c.b16 %v451, %v450
    %v526 = vpack.c.b16 %v453, %v452
    %v527 = vpack.c.b16 %v455, %v454
    %v528 = vpack.c.b16 %v457, %v456
    %v529 = vpack.c.b16 %v459, %v458
    %v530 = vpack.c.b16 %v461, %v460
    %v531 = vpack.c.b16 %v463, %v462
    %v532 = vpack.c.b16 %v465, %v464
    %v533 = vpack.c.b16 %v467, %v466
    %v534 = vpack.c.b16 %v469, %v468
    %v535 = vpack.c.b16 %v471, %v470
    %600 = vmatprep.subr.bf16.mxu0 0
    %601 = vmatpush1.bf16.msra.mxu0 %v472
    %602 = vmatprep.subr.bf16.mxu0 0
    %603 = vmatpush1.bf16.msra.mxu0 %v473
    %604 = vmatprep.subr.bf16.mxu0 0
    %605 = vmatpush1.bf16.msra.mxu0 %v474
    %606 = vmatprep.subr.bf16.mxu0 0
    %607 = vmatpush1.bf16.msra.mxu0 %v475
    %608 = vmatprep.subr.bf16.mxu0 0
    %609 = vmatpush1.bf16.msra.mxu0 %v476
    %610 = vmatprep.subr.bf16.mxu0 0
    %611 = vmatpush1.bf16.msra.mxu0 %v477
    %612 = vmatprep.subr.bf16.mxu0 0
    %613 = vmatpush1.bf16.msra.mxu0 %v478
    %614 = vmatprep.subr.bf16.mxu0 0
    %615 = vmatpush1.bf16.msra.mxu0 %v479
    %616 = vmatprep.subr.bf16.mxu0 0
    %617 = vmatpush1.bf16.msra.mxu0 %v480
    %618 = vmatprep.subr.bf16.mxu0 0
    %619 = vmatpush1.bf16.msra.mxu0 %v481
    %620 = vmatprep.subr.bf16.mxu0 0
    %621 = vmatpush1.bf16.msra.mxu0 %v482
    %622 = vmatprep.subr.bf16.mxu0 0
    %623 = vmatpush1.bf16.msra.mxu0 %v483
    %624 = vmatprep.subr.bf16.mxu0 0
    %625 = vmatpush1.bf16.msra.mxu0 %v484
    %626 = vmatprep.subr.bf16.mxu0 0
    %627 = vmatpush1.bf16.msra.mxu0 %v485
    %628 = vmatprep.subr.bf16.mxu0 0
    %629 = vmatpush1.bf16.msra.mxu0 %v486
    %630 = vmatprep.subr.bf16.mxu0 0
    %631 = vmatpush1.bf16.msra.mxu0 %v487
    %632 = vmatprep.mubr.bf16.mxu0 %v196
    %633 = vmatmul.mubr.bf16.gmra.mrb[0].mxu0 %v182
    %v634 = vpop.f32.mrb[0].mxu0
    %v635 = vadd.f32 %v156, %v634
    %v636 = vpop.f32.mrb[0].mxu0
    %v637 = vpop.f32.mrb[0].mxu0
    %v638 = vpop.f32.mrb[0].mxu0
    %639 = vdwg.mxu0
    %640 = vmatprep.subr.bf16.mxu0 0
    %641 = vmatpush1.bf16.msra.mxu0 %v488
    %642 = vmatprep.subr.bf16.mxu0 0
    %643 = vmatpush1.bf16.msra.mxu0 %v489
    %644 = vmatprep.subr.bf16.mxu0 0
    %645 = vmatpush1.bf16.msra.mxu0 %v490
    %646 = vmatprep.subr.bf16.mxu0 0
    %647 = vmatpush1.bf16.msra.mxu0 %v491
    %648 = vmatprep.subr.bf16.mxu0 0
    %649 = vmatpush1.bf16.msra.mxu0 %v492
    %650 = vmatprep.subr.bf16.mxu0 0
    %651 = vmatpush1.bf16.msra.mxu0 %v493
    %652 = vmatprep.subr.bf16.mxu0 0
    %653 = vmatpush1.bf16.msra.mxu0 %v494
    %654 = vmatprep.subr.bf16.mxu0 0
    %655 = vmatpush1.bf16.msra.mxu0 %v495
    %656 = vmatprep.subr.bf16.mxu0 0
    %657 = vmatpush1.bf16.msra.mxu0 %v496
    %658 = vmatprep.subr.bf16.mxu0 0
    %659 = vmatpush1.bf16.msra.mxu0 %v497
    %660 = vmatprep.subr.bf16.mxu0 0
    %661 = vmatpush1.bf16.msra.mxu0 %v498
    %662 = vmatprep.subr.bf16.mxu0 0
    %663 = vmatpush1.bf16.msra.mxu0 %v499
    %664 = vmatprep.subr.bf16.mxu0 0
    %665 = vmatpush1.bf16.msra.mxu0 %v500
    %666 = vmatprep.subr.bf16.mxu0 0
    %667 = vmatpush1.bf16.msra.mxu0 %v501
    %668 = vmatprep.subr.bf16.mxu0 0
    %669 = vmatpush1.bf16.msra.mxu0 %v502
    %670 = vmatprep.subr.bf16.mxu0 0
    %671 = vmatpush1.bf16.msra.mxu0 %v503
    %672 = vmatprep.mubr.bf16.mxu0 %v206
    %673 = vmatmul.mubr.bf16.gmra.mrb[0].mxu0 %v204
    %v674 = vpop.f32.mrb[0].mxu0
    %v675 = vadd.f32 %v635, %v674
    %v676 = vpop.f32.mrb[0].mxu0
    %v677 = vpop.f32.mrb[0].mxu0
    %v678 = vpop.f32.mrb[0].mxu0
    %679 = vdwg.mxu0
    %680 = vmatprep.subr.bf16.mxu0 0
    %681 = vmatpush1.bf16.msra.mxu0 %v504
    %682 = vmatprep.subr.bf16.mxu0 0
    %683 = vmatpush1.bf16.msra.mxu0 %v505
    %684 = vmatprep.subr.bf16.mxu0 0
    %685 = vmatpush1.bf16.msra.mxu0 %v506
    %686 = vmatprep.subr.bf16.mxu0 0
    %687 = vmatpush1.bf16.msra.mxu0 %v507
    %688 = vmatprep.subr.bf16.mxu0 0
    %689 = vmatpush1.bf16.msra.mxu0 %v508
    %690 = vmatprep.subr.bf16.mxu0 0
    %691 = vmatpush1.bf16.msra.mxu0 %v509
    %692 = vmatprep.subr.bf16.mxu0 0
    %693 = vmatpush1.bf16.msra.mxu0 %v510
    %694 = vmatprep.subr.bf16.mxu0 0
    %695 = vmatpush1.bf16.msra.mxu0 %v511
    %696 = vmatprep.subr.bf16.mxu0 0
    %697 = vmatpush1.bf16.msra.mxu0 %v512
    %698 = vmatprep.subr.bf16.mxu0 0
    %699 = vmatpush1.bf16.msra.mxu0 %v513
    %700 = vmatprep.subr.bf16.mxu0 0
    %701 = vmatpush1.bf16.msra.mxu0 %v514
    %702 = vmatprep.subr.bf16.mxu0 0
    %703 = vmatpush1.bf16.msra.mxu0 %v515
    %704 = vmatprep.subr.bf16.mxu0 0
    %705 = vmatpush1.bf16.msra.mxu0 %v516
    %706 = vmatprep.subr.bf16.mxu0 0
    %707 = vmatpush1.bf16.msra.mxu0 %v517
    %708 = vmatprep.subr.bf16.mxu0 0
    %709 = vmatpush1.bf16.msra.mxu0 %v518
    %710 = vmatprep.subr.bf16.mxu0 0
    %711 = vmatpush1.bf16.msra.mxu0 %v519
    %712 = vmatprep.mubr.bf16.mxu0 %v203
    %713 = vmatmul.mubr.bf16.gmra.mrb[0].mxu0 %v189
    %v714 = vpop.f32.mrb[0].mxu0
    %v715 = vadd.f32 %v675, %v714
    %v716 = vpop.f32.mrb[0].mxu0
    %v717 = vpop.f32.mrb[0].mxu0
    %v718 = vpop.f32.mrb[0].mxu0
    %719 = vdwg.mxu0
    %720 = vmatprep.subr.bf16.mxu0 0
    %721 = vmatpush1.bf16.msra.mxu0 %v520
    %722 = vmatprep.subr.bf16.mxu0 0
    %723 = vmatpush1.bf16.msra.mxu0 %v521
    %724 = vmatprep.subr.bf16.mxu0 0
    %725 = vmatpush1.bf16.msra.mxu0 %v522
    %726 = vmatprep.subr.bf16.mxu0 0
    %727 = vmatpush1.bf16.msra.mxu0 %v523
    %728 = vmatprep.subr.bf16.mxu0 0
    %729 = vmatpush1.bf16.msra.mxu0 %v524
    %730 = vmatprep.subr.bf16.mxu0 0
    %731 = vmatpush1.bf16.msra.mxu0 %v525
    %732 = vmatprep.subr.bf16.mxu0 0
    %733 = vmatpush1.bf16.msra.mxu0 %v526
    %734 = vmatprep.subr.bf16.mxu0 0
    %735 = vmatpush1.bf16.msra.mxu0 %v527
    %736 = vmatprep.subr.bf16.mxu0 0
    %737 = vmatpush1.bf16.msra.mxu0 %v528
    %738 = vmatprep.subr.bf16.mxu0 0
    %739 = vmatpush1.bf16.msra.mxu0 %v529
    %740 = vmatprep.subr.bf16.mxu0 0
    %741 = vmatpush1.bf16.msra.mxu0 %v530
    %742 = vmatprep.subr.bf16.mxu0 0
    %743 = vmatpush1.bf16.msra.mxu0 %v531
    %744 = vmatprep.subr.bf16.mxu0 0
    %745 = vmatpush1.bf16.msra.mxu0 %v532
    %746 = vmatprep.subr.bf16.mxu0 0
    %747 = vmatpush1.bf16.msra.mxu0 %v533
    %748 = vmatprep.subr.bf16.mxu0 0
    %749 = vmatpush1.bf16.msra.mxu0 %v534
    %750 = vmatprep.subr.bf16.mxu0 0
    %751 = vmatpush1.bf16.msra.mxu0 %v535
    %752 = vmatprep.mubr.bf16.mxu0 %v207
    %753 = vmatmul.mubr.bf16.gmra.mrb[0].mxu0 %v205
    %v754 = vpop.f32.mrb[0].mxu0
    %v755 = vadd.f32 %v715, %v754
    %v756 = vpop.f32.mrb[0].mxu0
    %v757 = vpop.f32.mrb[0].mxu0
    %v758 = vpop.f32.mrb[0].mxu0
    %759 = vdwg.mxu0
    %v760 = vmax.f32 %v755, 0.0
    %v761 = vpack.c.bf16 %v760, %v760
    %v762 = vld [vmem:[%s3] sm:$0xf]
    %v763 = vld [vmem:[%s3 + $0x4] sm:$0xf]
    %v764 = vld [vmem:[%s3 + $0x8] sm:$0xf]
    %v765 = vld [vmem:[%s3 + $0xc] sm:$0xf]
    %v766 = vld [vmem:[%s4] sm:$0x1]
    %v768 = vlaneseq
    %v769 = vshrl.u32 %v768, 7
    %v770 = vsub.s32 0, %v769
    %v771 = vrot.slane %v766, %v770
    %v777 = vunpack.c.l.b16 %v762
    %v778 = vunpack.c.l.b16 %v763
    %v779 = vunpack.c.l.b16 %v764
    %v780 = vunpack.c.l.b16 %v765
    %v781 = vpack.c.b16 %v778, %v777
    %v782 = vpack.c.b16 %v780, %v779
    %vm785 = vcmask 261120
    %v787 = vsel %vm785, %v761, 0
    %789 = vmatprep.subr.bf16.mxu0 0
    %790 = vmatpush1.bf16.msra.mxu0 %v781
    %791 = vmatprep.subr.bf16.mxu0 0
    %792 = vmatpush1.bf16.msra.mxu0 %v782
    %793 = vmatprep.subr.bf16.mxu0 0
    %794 = vmatpush1.bf16.msra.mxu0 0
    %795 = vmatprep.subr.bf16.mxu0 0
    %796 = vmatpush1.bf16.msra.mxu0 0
    %797 = vmatprep.subr.bf16.mxu0 0
    %798 = vmatpush1.bf16.msra.mxu0 0
    %799 = vmatprep.subr.bf16.mxu0 0
    %800 = vmatpush1.bf16.msra.mxu0 0
    %801 = vmatprep.subr.bf16.mxu0 0
    %802 = vmatpush1.bf16.msra.mxu0 0
    %803 = vmatprep.subr.bf16.mxu0 0
    %804 = vmatpush1.bf16.msra.mxu0 0
    %805 = vmatprep.subr.bf16.mxu0 0
    %806 = vmatpush1.bf16.msra.mxu0 0
    %807 = vmatprep.subr.bf16.mxu0 0
    %808 = vmatpush1.bf16.msra.mxu0 0
    %809 = vmatprep.subr.bf16.mxu0 0
    %810 = vmatpush1.bf16.msra.mxu0 0
    %811 = vmatprep.subr.bf16.mxu0 0
    %812 = vmatpush1.bf16.msra.mxu0 0
    %813 = vmatprep.subr.bf16.mxu0 0
    %814 = vmatpush1.bf16.msra.mxu0 0
    %815 = vmatprep.subr.bf16.mxu0 0
    %816 = vmatpush1.bf16.msra.mxu0 0
    %817 = vmatprep.subr.bf16.mxu0 0
    %818 = vmatpush1.bf16.msra.mxu0 0
    %819 = vmatprep.subr.bf16.mxu0 0
    %820 = vmatpush1.bf16.msra.mxu0 0
    %821 = vmatprep.mubr.bf16.mxu0 0
    %822 = vmatmul.mubr.bf16.gmra.mrb[0].mxu0 %v787
    %v823 = vpop.f32.mrb[0].mxu0
    %v824 = vadd.f32 %v771, %v823
    %v825 = vpop.f32.mrb[0].mxu0
    %v826 = vpop.f32.mrb[0].mxu0
    %v827 = vpop.f32.mrb[0].mxu0
    %828 = vdwg.mxu0
    %v829 = vmul.f32 %v824, %v824
    %vm830 = vcmask 1041408
    %v831 = vsel %vm830, %v829, 0.0
    %832 = vadd.xlane.f32.xlu0 %v831
    %v833 = vpop.xlane.xlu0 %832
    %v834 = vrsqrt.pop %v833
    %v835 = vmul.f32 %v833, %v834
    %vm836 = vcmp.eq.f32.partialorder %v833, inf
    %v837 = vsel %vm836, %v833, %v835
    %vm838 = vcmp.eq.f32.partialorder %v833, 0.0
    %v839 = vand.u32 %v833, 2147483648
    %v840 = vsel %vm838, %v839, %v837
    %v841 = vmax.f32 %v840, 1e-12
    %v842 = vrcp.pop %v841
    %v843 = vmul.f32 %v824, %v842
    %844 = vmatprep.subr.mxu0 0.0
    %845 = vmatpush1.xpose.msra.mxu0 %v843
    %846 = vmatprep.subr.mxu0 0.0
    %847 = vmatpush1.xpose.msra.mxu0 0.0
    %848 = vmatprep.subr.mxu0 0.0
    %849 = vmatpush1.xpose.msra.mxu0 0.0
    %850 = vmatprep.subr.mxu0 0.0
    %851 = vmatpush1.xpose.msra.mxu0 0.0
    %852 = vmatprep.subr.mxu0 0.0
    %853 = vmatpush1.xpose.msra.mxu0 0.0
    %854 = vmatprep.subr.mxu0 0.0
    %855 = vmatpush1.xpose.msra.mxu0 0.0
    %856 = vmatprep.subr.mxu0 0.0
    %857 = vmatpush1.xpose.msra.mxu0 0.0
    %858 = vmatprep.subr.mxu0 0.0
    %859 = vmatpush1.xpose.msra.mxu0 0.0
    %860 = vmatprep.subr.mxu0 0.0
    %861 = vmatpush1.xpose.msra.mxu0 0.0
    %862 = vmatprep.subr.mxu0 0.0
    %863 = vmatpush1.xpose.msra.mxu0 0.0
    %864 = vmatprep.subr.mxu0 0.0
    %865 = vmatpush1.xpose.msra.mxu0 0.0
    %866 = vmatprep.subr.mxu0 0.0
    %867 = vmatpush1.xpose.msra.mxu0 0.0
    %868 = vmatprep.subr.mxu0 0.0
    %869 = vmatpush1.xpose.msra.mxu0 0.0
    %870 = vmatprep.subr.mxu0 0.0
    %871 = vmatpush1.xpose.msra.mxu0 0.0
    %872 = vmatprep.subr.mxu0 0.0
    %873 = vmatpush1.xpose.msra.mxu0 0.0
    %874 = vmatprep.subr.mxu0 0.0
    %875 = vmatpush1.xpose.msra.mxu0 0.0
    %876 = vmatprep.subr.mxu0 0.0
    %877 = vmatpush1.xpose.msra.mxu0 0.0
    %878 = vmatprep.subr.mxu0 0.0
    %879 = vmatpush1.xpose.msra.mxu0 0.0
    %880 = vmatprep.subr.mxu0 0.0
    %881 = vmatpush1.xpose.msra.mxu0 0.0
    %882 = vmatprep.subr.mxu0 0.0
    %883 = vmatpush1.xpose.msra.mxu0 0.0
    %884 = vmatprep.subr.mxu0 0.0
    %885 = vmatpush1.xpose.msra.mxu0 0.0
    %886 = vmatprep.subr.mxu0 0.0
    %887 = vmatpush1.xpose.msra.mxu0 0.0
    %888 = vmatprep.subr.mxu0 0.0
    %889 = vmatpush1.xpose.msra.mxu0 0.0
    %890 = vmatprep.subr.mxu0 0.0
    %891 = vmatpush1.xpose.msra.mxu0 0.0
    %892 = vmatprep.subr.mxu0 0.0
    %893 = vmatpush1.xpose.msra.mxu0 0.0
    %894 = vmatprep.subr.mxu0 0.0
    %895 = vmatpush1.xpose.msra.mxu0 0.0
    %896 = vmatprep.subr.mxu0 0.0
    %897 = vmatpush1.xpose.msra.mxu0 0.0
    %898 = vmatprep.subr.mxu0 0.0
    %899 = vmatpush1.xpose.msra.mxu0 0.0
    %900 = vmatprep.subr.mxu0 0.0
    %901 = vmatpush1.xpose.msra.mxu0 0.0
    %902 = vmatprep.subr.mxu0 0.0
    %903 = vmatpush1.xpose.msra.mxu0 0.0
    %904 = vmatprep.subr.mxu0 0.0
    %905 = vmatpush1.xpose.msra.mxu0 0.0
    %906 = vmatprep.subr.mxu0 0.0
    %907 = vmatpush1.xpose.msra.mxu0 0.0
    %908 = vmatprep.mubr.f32.mxu0 0.0
    %909 = vmatmul.mubr.f32.gmra.mrb[0].mxu0 %v843
    %v910 = vpop.f32.mrb[0].mxu0
    %v911 = vadd.f32 0.0, %v910
    %v912 = vpop.f32.mrb[0].mxu0
    %913 = vdwg.mxu0
    %v914 = vmul.f32 %v911, 2.0
    %v915 = vmul.f32 %v843, %v843
    %v916 = vsel %vm830, %v915, 0.0
    %917 = vadd.xlane.f32.xlu0 %v916
    %v918 = vpop.xlane.xlu0 %917
    %v919 = vmul.f32 %v918, 2.0
    %vm920 = vcmask 9216
    %v921 = vsel %vm920, %v914, -inf
    %922 = vmax.xlane.f32.xlu0 %v921
    %v923 = vpop.xlane.xlu0 %922
    %v924 = vsub.f32 %v914, %v923
    %v925 = vmul.f32 %v924, 1.442695
    %v926 = vpow.pop %v925
    %v927 = vsel %vm920, %v926, 0.0
    %928 = vadd.xlane.f32.xlu0 %v927
    %v929 = vpop.xlane.xlu0 %928
    %v930 = vmul.f32 %v929, 2.0
    %v931 = vsub.f32 %v919, %v923
    %v932 = vmul.f32 %v931, 1.442695
    %v933 = vpow.pop %v932
    %v934 = vsub.f32 %v930, %v933
    %v935 = vlog2.pop %v934
    %v936 = vmul.f32 %v935, 0.6931472
    %v937 = vadd.f32 %v923, %v936
    %v938 = vsub.f32 %v937, %v919
    %vm939 = vcmask 1024
    %v940 = vsel %vm939, %v938, 0.0
    %941 = vadd.xlane.f32.xlu0 %v940
    %v942 = vpop.xlane.xlu0 %941
    %v943 = vrot.slane %v942, 4
    %v944 = vadd.f32 %v942, %v943
    %v945 = vrot.slane %v944, 2
    %v946 = vadd.f32 %v944, %v945
    %v947 = vrot.slane %v946, 1
    %v948 = vadd.f32 %v946, %v947
    %s949 = vtos %v948
    %v950 = vrcp.pop 2.0
    %s951 = vtos %v950
    %s952 = smul.f32 %s949, %s951
    %s953 = scalar_lea.smem [#allocation2], 0
    %954 = sst [smem:[%s953]] %s952
    // Predicated region
    $region22: #{simclr_forward.1} parent=1 // pred_check
      _
    $region23: #{simclr_forward.1} parent=1 // pred_check_branch
      %956 = sbr.rel (0) target = $region25
    $region24: #{simclr_forward.1} parent=1 // pred_region
      %s958 = ssub.s32 16, 16
      %959 = vsyncadd [#allocation3], %s958
      %962 = dma.smem_to_hbm [#allocation2], 16, %s5, [#allocation3]
    $region25: #{simclr_forward.1} parent=1 // pred_fallthru
      _
    // Predicated region
    $region26: #{simclr_forward.1} parent=1 // pred_check
      _
    $region27: #{simclr_forward.1} parent=1 // pred_check_branch
      %964 = sbr.rel (0) target = $region29
    $region28: #{simclr_forward.1} parent=1 // pred_region
      %965 = dma.done [#allocation3], 16
    $region29: #{simclr_forward.1} parent=1 // pred_fallthru
      _
    %966 = sfence
    %967 = vsyncpa [#allocation3], 1

</llo_original>
